<compile_context>
chip_gen: v6e
topology: v6e:2x2x1
jax: 0.10.0
libtpu: 0.0.40
codegen_flags: <defaults>
</compile_context>

<pallas_src>
import functools

import jax
import jax.numpy as jnp
from jax.experimental import pallas as pl
from jax.experimental.pallas import tpu as pltpu

EPS = 1e-6
_TARGET_BLOCK_ELEMS = 256 * 1024  # ~1 MiB per f32 input block


def _dice_kernel(*refs, tile_rows, sub, lanes, rows_total, steps_per_chunk,
                 has_weights, needs_mask):
    if has_weights:
        pred_ref, gt_ref, mask_ref, w_ref, out_ref = refs
    else:
        pred_ref, gt_ref, mask_ref, out_ref = refs
        w_ref = None

    s = pl.program_id(1)

    zero = jnp.zeros((sub, lanes), jnp.float32)
    acc_pgm = zero   # sum(p * g * m)
    acc_pm = zero    # sum(p * m)
    acc_gm = zero    # sum(g * m)

    if needs_mask:
        # Global row offset of this block (p * spc + s may exceed the real
        # block count for over-allocated chunks; those rows are masked off).
        base = (pl.program_id(0) * steps_per_chunk + s) * tile_rows
        row = jax.lax.broadcasted_iota(jnp.int32, (sub, lanes), 0)  # hoisted

    # Stream the tile one (sub, lanes) row group at a time: loads go straight
    # into register-resident accumulators, no big VMEM temporaries.
    for r0 in range(0, tile_rows, sub):
        sl = pl.ds(r0, sub)
        p = pred_ref[sl, :].astype(jnp.float32)
        g = gt_ref[sl, :].astype(jnp.float32)
        m = mask_ref[sl, :].astype(jnp.float32)
        if has_weights:
            m = m * w_ref[sl, :].astype(jnp.float32)
        if needs_mask:
            valid = (base + r0 + row) < rows_total
            p = jnp.where(valid, p, 0.0)
            g = jnp.where(valid, g, 0.0)
            m = jnp.where(valid, m, 0.0)
        pm = p * m
        acc_pm = acc_pm + pm
        acc_gm = acc_gm + g * m
        acc_pgm = acc_pgm + pm * g

    # Output block is resident across the inner ("arbitrary") axis: set on the
    # first step, accumulate afterwards; Pallas writes it back once per chunk.
    @pl.when(s == 0)
    def _():
        out_ref[0, 0] = acc_pgm
        out_ref[0, 1] = acc_pm
        out_ref[0, 2] = acc_gm

    @pl.when(s != 0)
    def _():
        out_ref[0, 0] += acc_pgm
        out_ref[0, 1] += acc_pm
        out_ref[0, 2] += acc_gm


def dice_loss(pred, gt, mask, weights=None, eps=EPS):
    """pred, gt: (N, 1, H, W); mask: (N, H, W); weights: optional (N, H, W)."""
    assert pred.ndim == 4, pred.ndim
    N, C, H, W = pred.shape
    assert gt.shape == pred.shape
    assert mask.shape == (N, H, W)

    # Channel squeeze: for C == 1 this is a pure (free) reshape, no copy.
    if C == 1:
        p = pred.reshape(-1)
        g = gt.reshape(-1)
    else:
        p = pred[:, 0, :, :].reshape(-1)
        g = gt[:, 0, :, :].reshape(-1)
    m = mask.reshape(-1)

    has_weights = weights is not None
    inputs = [p, g, m]
    if has_weights:
        assert weights.shape == mask.shape
        inputs.append(weights.reshape(-1))

    total = N * H * W

    # Lane-dense 2D slab layout.
    if total % 512 == 0:
        lanes = 512
    elif total % 256 == 0:
        lanes = 256
    else:
        lanes = 128
    pad = (-total) % lanes
    if pad:
        # Rare: zero lane-pad (zeros contribute nothing to any of the sums).
        inputs = [jnp.pad(x, (0, pad)) for x in inputs]
    rows = (total + pad) // lanes
    inputs = [x.reshape(rows, lanes) for x in inputs]

    tile_rows = min(rows, max(8, _TARGET_BLOCK_ELEMS // lanes))

    # Row-group size: keep the accumulator ~4 vregs and the unrolled loop
    # bounded (~64 groups) regardless of lane width.
    if tile_rows % 8 != 0 or tile_rows <= 8:
        sub = tile_rows            # tiny single-block case
    else:
        sub = 8
        while tile_rows // sub > 64 and tile_rows % (sub * 2) == 0:
            sub *= 2

    n_blocks = pl.cdiv(rows, tile_rows)
    n_par = 2 if n_blocks >= 2 else 1        # split across the 2 TCs on v7x
    steps_per_chunk = pl.cdiv(n_blocks, n_par)
    needs_clamp = n_par * steps_per_chunk > n_blocks
    needs_mask = (n_par * steps_per_chunk * tile_rows) != rows

    def make_in_map(spc, nb, clamp):
        def in_map(pi, si):
            b = pi * spc + si
            if clamp:
                b = jnp.minimum(b, nb - 1)  # re-read last block; rows masked
            return (b, 0)
        return in_map

    in_map = make_in_map(steps_per_chunk, n_blocks, needs_clamp)
    in_specs = [pl.BlockSpec((tile_rows, lanes), in_map) for _ in inputs]
    out_spec = pl.BlockSpec((1, 3, sub, lanes), lambda pi, si: (pi, 0, 0, 0))

    kernel = functools.partial(
        _dice_kernel,
        tile_rows=tile_rows,
        sub=sub,
        lanes=lanes,
        rows_total=rows,
        steps_per_chunk=steps_per_chunk,
        has_weights=has_weights,
        needs_mask=needs_mask,
    )

    bytes_accessed = sum(int(x.size) * x.dtype.itemsize for x in inputs)
    bytes_accessed += n_par * 3 * sub * lanes * 4
    cost = pl.CostEstimate(flops=(7 if has_weights else 6) * int(total),
                           transcendentals=0,
                           bytes_accessed=int(bytes_accessed))

    partials = pl.pallas_call(
        kernel,
        out_shape=jax.ShapeDtypeStruct((n_par, 3, sub, lanes), jnp.float32),
        grid_spec=pltpu.PrefetchScalarGridSpec(
            num_scalar_prefetch=0,
            grid=(n_par, steps_per_chunk),
            in_specs=in_specs,
            out_specs=out_spec,
        ),
        compiler_params=pltpu.CompilerParams(
            dimension_semantics=("parallel", "arbitrary"),
            vmem_limit_bytes=32 * 1024 * 1024,
        ),
        cost_estimate=cost,
    )(*inputs)

    # Tiny follow-up reduction (<=48 KiB) + scalar epilogue.
    sums = jnp.sum(partials, axis=(0, 2, 3))          # (3,)
    intersection = sums[0]
    union = sums[1] + sums[2] + jnp.float32(eps)
    return jnp.float32(1.0) - jnp.float32(2.0) * intersection / union


def dice_loss_ref(pred, gt, mask, weights=None):
    """Pure-JAX reference mirroring the PyTorch module."""
    p = pred[:, 0, :, :]
    g = gt[:, 0, :, :]
    m = mask
    if weights is not None:
        m = weights * m
    intersection = jnp.sum(p * g * m)
    union = jnp.sum(p * m) + jnp.sum(g * m) + EPS
    return 1.0 - 2.0 * intersection / union


if __name__ == "__main__":
    key = jax.random.PRNGKey(0)
    k1, k2, k3, k4 = jax.random.split(key, 4)

    # Small shapes consistent with the module: (N, 1, H, W) heatmaps.
    N, C, H, W = 2, 1, 16, 16
    pred = jax.nn.sigmoid(jax.random.normal(k1, (N, C, H, W), jnp.float32))
    gt = (jax.random.uniform(k2, (N, C, H, W)) > 0.5).astype(jnp.float32)
    mask = (jax.random.uniform(k3, (N, H, W)) > 0.2).astype(jnp.float32)
    weights = jax.random.uniform(k4, (N, H, W), jnp.float32) + 0.5

    # Case 1: no weights.
    out = jax.block_until_ready(dice_loss(pred, gt, mask))
    ref = dice_loss_ref(pred, gt, mask)
    assert jnp.allclose(out, ref, rtol=1e-5, atol=1e-5), (out, ref)
    assert float(out) <= 1.0

    # Case 2: weights folded inside the kernel.
    out_w = jax.block_until_ready(dice_loss(pred, gt, mask, weights))
    ref_w = dice_loss_ref(pred, gt, mask, weights)
    assert jnp.allclose(out_w, ref_w, rtol=1e-5, atol=1e-5), (out_w, ref_w)
    assert float(out_w) <= 1.0

    # Case 3: bf16 inputs stay bf16 into the kernel (cast-after-load inside).
    pred_b = pred.astype(jnp.bfloat16)
    gt_b = gt.astype(jnp.bfloat16)
    mask_b = mask.astype(jnp.bfloat16)
    out_b = jax.block_until_ready(dice_loss(pred_b, gt_b, mask_b))
    ref_b = dice_loss_ref(pred_b.astype(jnp.float32),
                          gt_b.astype(jnp.float32),
                          mask_b.astype(jnp.float32))
    assert jnp.allclose(out_b, ref_b, rtol=1e-4, atol=1e-4), (out_b, ref_b)

    # Case 4: larger shape exercising the (parallel, arbitrary) grid, the
    # block-index clamp and the partial-tile row mask.
    kk1, kk2, kk3 = jax.random.split(jax.random.PRNGKey(1), 3)
    N2, H2, W2 = 2, 520, 512
    pred2 = jax.random.uniform(kk1, (N2, 1, H2, W2), jnp.float32)
    gt2 = (jax.random.uniform(kk2, (N2, 1, H2, W2)) > 0.5).astype(jnp.float32)
    mask2 = (jax.random.uniform(kk3, (N2, H2, W2)) > 0.2).astype(jnp.float32)
    out2 = jax.block_until_ready(dice_loss(pred2, gt2, mask2))
    ref2 = dice_loss_ref(pred2, gt2, mask2)
    assert jnp.allclose(out2, ref2, rtol=1e-4, atol=1e-4), (out2, ref2)

    # Case 5: odd shape hitting the lanes=128 fallback + lane zero-pad.
    kk4, kk5, kk6 = jax.random.split(jax.random.PRNGKey(2), 3)
    N3, H3, W3 = 2, 13, 17
    pred3 = jax.random.uniform(kk4, (N3, 1, H3, W3), jnp.float32)
    gt3 = (jax.random.uniform(kk5, (N3, 1, H3, W3)) > 0.5).astype(jnp.float32)
    mask3 = (jax.random.uniform(kk6, (N3, H3, W3)) > 0.2).astype(jnp.float32)
    out3 = jax.block_until_ready(dice_loss(pred3, gt3, mask3))
    ref3 = dice_loss_ref(pred3, gt3, mask3)
    assert jnp.allclose(out3, ref3, rtol=1e-5, atol=1e-5), (out3, ref3)

    print("KERNEL_OK")
</pallas_src>

<mosaic_0001>
module attributes {stable_mosaic.version = 11 : i64} {
  func.func @_dice_kernel(%arg0: i32, %arg1: i32, %arg2: memref<1x512xf32, #tpu.memory_space<vmem>>, %arg3: memref<1x512xf32, #tpu.memory_space<vmem>>, %arg4: memref<1x512xf32, #tpu.memory_space<vmem>>, %arg5: memref<1x3x1x512xf32, #tpu.memory_space<vmem>>) attributes {dimension_semantics = [#tpu.dimension_semantics<parallel>, #tpu.dimension_semantics<arbitrary>], iteration_bounds = array<i64: 1, 1>, scalar_prefetch = 0 : i64, scratch_operands = 0 : i64, tpu.core_type = #tpu.core_type<tc>, window_params = [{transform_indices = @transform_0, window_bounds = array<i64: 1, 512>}, {transform_indices = @transform_1, window_bounds = array<i64: 1, 512>}, {transform_indices = @transform_2, window_bounds = array<i64: 1, 512>}, {transform_indices = @transform_3, window_bounds = array<i64: 1, 3, 1, 512>}]} {
    %cst = arith.constant 0.000000e+00 : f32
    %0 = vector.broadcast %cst : f32 to vector<1x512xf32>
    %c0 = arith.constant 0 : index
    %c0_0 = arith.constant 0 : index
    %1 = vector.load %arg2[%c0, %c0_0] : memref<1x512xf32, #tpu.memory_space<vmem>>, vector<1x512xf32>
    %c0_1 = arith.constant 0 : index
    %c0_2 = arith.constant 0 : index
    %2 = vector.load %arg3[%c0_1, %c0_2] : memref<1x512xf32, #tpu.memory_space<vmem>>, vector<1x512xf32>
    %c0_3 = arith.constant 0 : index
    %c0_4 = arith.constant 0 : index
    %3 = vector.load %arg4[%c0_3, %c0_4] : memref<1x512xf32, #tpu.memory_space<vmem>>, vector<1x512xf32>
    %4 = arith.mulf %1, %3 : vector<1x512xf32>
    %5 = arith.addf %0, %4 : vector<1x512xf32>
    %6 = arith.mulf %2, %3 : vector<1x512xf32>
    %7 = arith.addf %0, %6 : vector<1x512xf32>
    %8 = arith.mulf %4, %2 : vector<1x512xf32>
    %9 = arith.addf %0, %8 : vector<1x512xf32>
    %c0_i32 = arith.constant 0 : i32
    %10 = arith.cmpi eq, %arg1, %c0_i32 : i32
    %11 = arith.extui %10 : i1 to i32
    %c0_i32_5 = arith.constant 0 : i32
    %12 = arith.cmpi ne, %11, %c0_i32_5 : i32
    scf.if %12 {
      %c0_8 = arith.constant 0 : index
      %c0_9 = arith.constant 0 : index
      %c0_10 = arith.constant 0 : index
      %c0_11 = arith.constant 0 : index
      %16 = vector.load %arg5[%c0_8, %c0_9, %c0_10, %c0_11] : memref<1x3x1x512xf32, #tpu.memory_space<vmem>>, vector<1x1x1x512xf32>
      %17 = vector.shape_cast %16 : vector<1x1x1x512xf32> to vector<1x512xf32>
      %18 = vector.shape_cast %9 : vector<1x512xf32> to vector<1x1x1x512xf32>
      tpu.vector_store %arg5[%c0_8, %c0_9, %c0_10, %c0_11], %18 {strides = array<i32>} : memref<1x3x1x512xf32, #tpu.memory_space<vmem>>, vector<1x1x1x512xf32>,
      %c0_12 = arith.constant 0 : index
      %c1 = arith.constant 1 : index
      %c0_13 = arith.constant 0 : index
      %c0_14 = arith.constant 0 : index
      %19 = vector.load %arg5[%c0_12, %c1, %c0_13, %c0_14] : memref<1x3x1x512xf32, #tpu.memory_space<vmem>>, vector<1x1x1x512xf32>
      %20 = vector.shape_cast %19 : vector<1x1x1x512xf32> to vector<1x512xf32>
      %21 = vector.shape_cast %5 : vector<1x512xf32> to vector<1x1x1x512xf32>
      tpu.vector_store %arg5[%c0_12, %c1, %c0_13, %c0_14], %21 {strides = array<i32>} : memref<1x3x1x512xf32, #tpu.memory_space<vmem>>, vector<1x1x1x512xf32>,
      %c0_15 = arith.constant 0 : index
      %c2 = arith.constant 2 : index
      %c0_16 = arith.constant 0 : index
      %c0_17 = arith.constant 0 : index
      %22 = vector.load %arg5[%c0_15, %c2, %c0_16, %c0_17] : memref<1x3x1x512xf32, #tpu.memory_space<vmem>>, vector<1x1x1x512xf32>
      %23 = vector.shape_cast %22 : vector<1x1x1x512xf32> to vector<1x512xf32>
      %24 = vector.shape_cast %7 : vector<1x512xf32> to vector<1x1x1x512xf32>
      tpu.vector_store %arg5[%c0_15, %c2, %c0_16, %c0_17], %24 {strides = array<i32>} : memref<1x3x1x512xf32, #tpu.memory_space<vmem>>, vector<1x1x1x512xf32>,
    } else {
    }
    %c0_i32_6 = arith.constant 0 : i32
    %13 = arith.cmpi ne, %arg1, %c0_i32_6 : i32
    %14 = arith.extui %13 : i1 to i32
    %c0_i32_7 = arith.constant 0 : i32
    %15 = arith.cmpi ne, %14, %c0_i32_7 : i32
    scf.if %15 {
      %c0_8 = arith.constant 0 : index
      %c0_9 = arith.constant 0 : index
      %c0_10 = arith.constant 0 : index
      %c0_11 = arith.constant 0 : index
      %16 = vector.load %arg5[%c0_8, %c0_9, %c0_10, %c0_11] : memref<1x3x1x512xf32, #tpu.memory_space<vmem>>, vector<1x1x1x512xf32>
      %17 = vector.shape_cast %16 : vector<1x1x1x512xf32> to vector<1x512xf32>
      %18 = arith.addf %17, %9 : vector<1x512xf32>
      %c0_12 = arith.constant 0 : index
      %c0_13 = arith.constant 0 : index
      %c0_14 = arith.constant 0 : index
      %c0_15 = arith.constant 0 : index
      %19 = vector.load %arg5[%c0_12, %c0_13, %c0_14, %c0_15] : memref<1x3x1x512xf32, #tpu.memory_space<vmem>>, vector<1x1x1x512xf32>
      %20 = vector.shape_cast %19 : vector<1x1x1x512xf32> to vector<1x512xf32>
      %21 = vector.shape_cast %18 : vector<1x512xf32> to vector<1x1x1x512xf32>
      tpu.vector_store %arg5[%c0_12, %c0_13, %c0_14, %c0_15], %21 {strides = array<i32>} : memref<1x3x1x512xf32, #tpu.memory_space<vmem>>, vector<1x1x1x512xf32>,
      %c0_16 = arith.constant 0 : index
      %c1 = arith.constant 1 : index
      %c0_17 = arith.constant 0 : index
      %c0_18 = arith.constant 0 : index
      %22 = vector.load %arg5[%c0_16, %c1, %c0_17, %c0_18] : memref<1x3x1x512xf32, #tpu.memory_space<vmem>>, vector<1x1x1x512xf32>
      %23 = vector.shape_cast %22 : vector<1x1x1x512xf32> to vector<1x512xf32>
      %24 = arith.addf %23, %5 : vector<1x512xf32>
      %c0_19 = arith.constant 0 : index
      %c1_20 = arith.constant 1 : index
      %c0_21 = arith.constant 0 : index
      %c0_22 = arith.constant 0 : index
      %25 = vector.load %arg5[%c0_19, %c1_20, %c0_21, %c0_22] : memref<1x3x1x512xf32, #tpu.memory_space<vmem>>, vector<1x1x1x512xf32>
      %26 = vector.shape_cast %25 : vector<1x1x1x512xf32> to vector<1x512xf32>
      %27 = vector.shape_cast %24 : vector<1x512xf32> to vector<1x1x1x512xf32>
      tpu.vector_store %arg5[%c0_19, %c1_20, %c0_21, %c0_22], %27 {strides = array<i32>} : memref<1x3x1x512xf32, #tpu.memory_space<vmem>>, vector<1x1x1x512xf32>,
      %c0_23 = arith.constant 0 : index
      %c2 = arith.constant 2 : index
      %c0_24 = arith.constant 0 : index
      %c0_25 = arith.constant 0 : index
      %28 = vector.load %arg5[%c0_23, %c2, %c0_24, %c0_25] : memref<1x3x1x512xf32, #tpu.memory_space<vmem>>, vector<1x1x1x512xf32>
      %29 = vector.shape_cast %28 : vector<1x1x1x512xf32> to vector<1x512xf32>
      %30 = arith.addf %29, %7 : vector<1x512xf32>
      %c0_26 = arith.constant 0 : index
      %c2_27 = arith.constant 2 : index
      %c0_28 = arith.constant 0 : index
      %c0_29 = arith.constant 0 : index
      %31 = vector.load %arg5[%c0_26, %c2_27, %c0_28, %c0_29] : memref<1x3x1x512xf32, #tpu.memory_space<vmem>>, vector<1x1x1x512xf32>
      %32 = vector.shape_cast %31 : vector<1x1x1x512xf32> to vector<1x512xf32>
      %33 = vector.shape_cast %30 : vector<1x512xf32> to vector<1x1x1x512xf32>
      tpu.vector_store %arg5[%c0_26, %c2_27, %c0_28, %c0_29], %33 {strides = array<i32>} : memref<1x3x1x512xf32, #tpu.memory_space<vmem>>, vector<1x1x1x512xf32>,
    } else {
    }
    return
  }
  func.func @transform_0(%arg0: i32, %arg1: i32) -> (i32, i32) {
    %c1_i32 = arith.constant 1 : i32
    %0 = arith.muli %arg0, %c1_i32 : i32
    %1 = arith.addi %0, %arg1 : i32
    %c0_i32 = arith.constant 0 : i32
    %c0_i32_0 = arith.constant 0 : i32
    return %1, %c0_i32 : i32, i32
  }
  func.func @transform_1(%arg0: i32, %arg1: i32) -> (i32, i32) {
    %c1_i32 = arith.constant 1 : i32
    %0 = arith.muli %arg0, %c1_i32 : i32
    %1 = arith.addi %0, %arg1 : i32
    %c0_i32 = arith.constant 0 : i32
    %c0_i32_0 = arith.constant 0 : i32
    return %1, %c0_i32 : i32, i32
  }
  func.func @transform_2(%arg0: i32, %arg1: i32) -> (i32, i32) {
    %c1_i32 = arith.constant 1 : i32
    %0 = arith.muli %arg0, %c1_i32 : i32
    %1 = arith.addi %0, %arg1 : i32
    %c0_i32 = arith.constant 0 : i32
    %c0_i32_0 = arith.constant 0 : i32
    return %1, %c0_i32 : i32, i32
  }
  func.func @transform_3(%arg0: i32, %arg1: i32) -> (i32, i32, i32, i32) {
    %c0_i32 = arith.constant 0 : i32
    %c0_i32_0 = arith.constant 0 : i32
    %c0_i32_1 = arith.constant 0 : i32
    %c0_i32_2 = arith.constant 0 : i32
    return %arg0, %c0_i32, %c0_i32_0, %c0_i32_1 : i32, i32, i32, i32
  }
}

</mosaic_0001>

<llo_original>
// kernel: tpu_custom_call.1
$region0: #{tpu_custom_call.1}
  #allocation0 [shape = 'u32[]', space=smem, size = 0x4, offset = 0x4, fixed_abs, tag = 'smem constant byte address 0x4 - core index']
  #allocation1 [shape = 'u32[144,128]{1,0:T(1,128)}', space=vmem, size = 0x12000, scoped, tag = 'internal scratch']
  %s0 = inlined_call_operand.hbm [shape: f32[1,512], index: 0, kind: input, shape index: {}]
  %s1 = inlined_call_operand.hbm [shape: f32[1,512], index: 1, kind: input, shape index: {}]
  %s2 = inlined_call_operand.hbm [shape: f32[1,512], index: 2, kind: input, shape index: {}]
  %s3 = inlined_call_operand.hbm [shape: f32[1,3,1,512], index: 3, kind: output, shape index: {}]
  %s4 = sld [smem:[#allocation0]]
  $region42: #{tpu_custom_call.1} parent=0
    _
  %s6 = ssub.s32 1, %s4
  %s7 = scalar_select 0, %s6, %s4
  $region1: #{tpu_custom_call.1} parent=0
    #allocation2 [shape = 'u8[2048]{0}', space=vmem, size = 0x800, scoped, tag = 'input window, operand 0, single buffered']
    #allocation3 [shape = 's32[1]{0}', space=sflag, size = 0x4, scoped, tag = 'scoped memory for tpu_custom_call.1']
    #allocation4 [shape = 's32[1]{0}', space=sflag, size = 0x4, scoped, tag = 'scoped memory for tpu_custom_call.1']
    #allocation5 [shape = 'u8[2048]{0}', space=vmem, size = 0x800, scoped, tag = 'input window, operand 1, single buffered']
    #allocation6 [shape = 's32[1]{0}', space=sflag, size = 0x4, scoped, tag = 'scoped memory for tpu_custom_call.1']
    #allocation7 [shape = 'u8[2048]{0}', space=vmem, size = 0x800, scoped, tag = 'input window, operand 2, single buffered']
    #allocation8 [shape = 'u8[6144]{0}', space=vmem, size = 0x1800, scoped, tag = 'output window, operand 0, single buffered']
    %8 = vsyncpa [#allocation3], 0
    %9 = vsyncpa [#allocation6], 0
    %10 = vsyncpa [#allocation4], 0
    // Predicated region
    $region2: #{tpu_custom_call.1} parent=1 // pred_check
      _
    $region3: #{tpu_custom_call.1} parent=1 // pred_check_branch
      %12 = sbr.rel (0) target = $region5
    $region4: #{tpu_custom_call.1} parent=1 // pred_region
      %s13 = sadd.s32 0, 0
      %s15 = ssub.s32 64, 64
      %16 = vsyncadd [#allocation3], %s15
      %s17 = smul.addr %s13, 4
      %s18 = smul.addr %s17, 16
      %s19 = scalar_lea.hbm %s0, %s18
      %s21 = sshll.u32 [#allocation2], 4
      %s22 = int_to_ptr.vmem [resolvable:$true] %s21
      %24 = dma.hbm_to_vmem [thread:$0]  %s19, 64, %s22, [#allocation3]
    $region5: #{tpu_custom_call.1} parent=1 // pred_fallthru
      _
    // Predicated region
    $region6: #{tpu_custom_call.1} parent=1 // pred_check
      _
    $region7: #{tpu_custom_call.1} parent=1 // pred_check_branch
      %26 = sbr.rel (0) target = $region9
    $region8: #{tpu_custom_call.1} parent=1 // pred_region
      %s27 = sadd.s32 0, 0
      %s29 = ssub.s32 64, 64
      %30 = vsyncadd [#allocation6], %s29
      %s31 = smul.addr %s27, 4
      %s32 = smul.addr %s31, 16
      %s33 = scalar_lea.hbm %s1, %s32
      %s35 = sshll.u32 [#allocation5], 4
      %s36 = int_to_ptr.vmem [resolvable:$true] %s35
      %38 = dma.hbm_to_vmem [thread:$0]  %s33, 64, %s36, [#allocation6]
    $region9: #{tpu_custom_call.1} parent=1 // pred_fallthru
      _
    // Predicated region
    $region10: #{tpu_custom_call.1} parent=1 // pred_check
      _
    $region11: #{tpu_custom_call.1} parent=1 // pred_check_branch
      %40 = sbr.rel (0) target = $region13
    $region12: #{tpu_custom_call.1} parent=1 // pred_region
      %s41 = sadd.s32 0, 0
      %s43 = ssub.s32 64, 64
      %44 = vsyncadd [#allocation6], %s43
      %s45 = smul.addr %s41, 4
      %s46 = smul.addr %s45, 16
      %s47 = scalar_lea.hbm %s2, %s46
      %s49 = sshll.u32 [#allocation7], 4
      %s50 = int_to_ptr.vmem [resolvable:$true] %s49
      %52 = dma.hbm_to_vmem [thread:$0]  %s47, 64, %s50, [#allocation6]
    $region13: #{tpu_custom_call.1} parent=1 // pred_fallthru
      _
    // Predicated region
    $region14: #{tpu_custom_call.1} parent=1 // pred_check
      _
    $region15: #{tpu_custom_call.1} parent=1 // pred_check_branch
      %54 = sbr.rel (0) target = $region17
    $region16: #{tpu_custom_call.1} parent=1 // pred_region
      %55 = dma.done [#allocation3], 64
    $region17: #{tpu_custom_call.1} parent=1 // pred_fallthru
      _
    // Predicated region
    $region18: #{tpu_custom_call.1} parent=1 // pred_check
      _
    $region19: #{tpu_custom_call.1} parent=1 // pred_check_branch
      %57 = sbr.rel (0) target = $region21
    $region20: #{tpu_custom_call.1} parent=1 // pred_region
      %58 = dma.done [#allocation6], 64
    $region21: #{tpu_custom_call.1} parent=1 // pred_fallthru
      _
    // Predicated region
    $region22: #{tpu_custom_call.1} parent=1 // pred_check
      _
    $region23: #{tpu_custom_call.1} parent=1 // pred_check_branch
      %60 = sbr.rel (0) target = $region25
    $region24: #{tpu_custom_call.1} parent=1 // pred_region
      %61 = dma.done [#allocation6], 64
    $region25: #{tpu_custom_call.1} parent=1 // pred_fallthru
      _
    %s62 = sadd.s32 0, 0
    %s63 = sadd.s32 0, 0
    %s64 = sadd.s32 0, 0
    %v65 = vld [vmem:[#allocation2] sm:$0xf]
    %v66 = vld [vmem:[#allocation5] sm:$0xf]
    %v67 = vld [vmem:[#allocation7] sm:$0xf]
    %v68 = vmul.f32 %v65, %v67
    %v69 = vadd.f32 %v68, 0.0
    %v70 = vmul.f32 %v66, %v67
    %v71 = vadd.f32 %v70, 0.0
    %v72 = vmul.f32 %v68, %v66
    %v73 = vadd.f32 %v72, 0.0
    %p74 = scmp.eq.s32.totalorder 0, 0
    // Predicated region
    $region26: #{tpu_custom_call.1} parent=1 // pred_check
      %p75 = pneg %p74
    $region27: #{tpu_custom_call.1} parent=1 // pred_check_branch
      %77 = sbr.rel (%p75) target = $region29
    $region28: #{tpu_custom_call.1} parent=1 // pred_region
      %v78 = vlaneseq
      %vm79 = vcmp.ge.s32.totalorder %v78, 0
      %vm80 = vcmp.lt.s32.totalorder %v78, 512
      %vm81 = vmand %vm79, %vm80
      %82 = vst.msk [vmem:[#allocation8] sm:$0xf] %vm81, %v73
      %s83 = scalar_lea.vmem [#allocation8], 4
      %84 = vst.msk [vmem:[%s83] sm:$0xf] %vm81, %v69
      %s85 = scalar_lea.vmem [#allocation8], 8
      %86 = vst.msk [vmem:[%s85] sm:$0xf] %vm81, %v71
    $region29: #{tpu_custom_call.1} parent=1 // pred_fallthru
      _
    %p87 = scmp.ne.s32.totalorder 0, 0
    // Predicated region
    $region30: #{tpu_custom_call.1} parent=1 // pred_check
      %p88 = pneg %p87
    $region31: #{tpu_custom_call.1} parent=1 // pred_check_branch
      %90 = sbr.rel (%p88) target = $region33
    $region32: #{tpu_custom_call.1} parent=1 // pred_region
      %v91 = vld [vmem:[#allocation8] sm:$0xf]
      %v92 = vadd.f32 %v91, %v73
      %v93 = vlaneseq
      %vm94 = vcmp.ge.s32.totalorder %v93, 0
      %vm95 = vcmp.lt.s32.totalorder %v93, 512
      %vm96 = vmand %vm94, %vm95
      %97 = vst.msk [vmem:[#allocation8] sm:$0xf] %vm96, %v92
      %s98 = scalar_lea.vmem [#allocation8], 4
      %v99 = vld [vmem:[%s98] sm:$0xf]
      %v100 = vadd.f32 %v99, %v69
      %101 = vst.msk [vmem:[%s98] sm:$0xf] %vm96, %v100
      %s102 = scalar_lea.vmem [#allocation8], 8
      %v103 = vld [vmem:[%s102] sm:$0xf]
      %v104 = vadd.f32 %v103, %v71
      %105 = vst.msk [vmem:[%s102] sm:$0xf] %vm96, %v104
    $region33: #{tpu_custom_call.1} parent=1 // pred_fallthru
      _
    // Predicated region
    $region34: #{tpu_custom_call.1} parent=1 // pred_check
      _
    $region35: #{tpu_custom_call.1} parent=1 // pred_check_branch
      %107 = sbr.rel (0) target = $region37
    $region36: #{tpu_custom_call.1} parent=1 // pred_region
      %s109 = ssub.s32 192, 192
      %110 = vsyncadd [#allocation4], %s109
      %s111 = sshll.u32 [#allocation8], 4
      %s112 = int_to_ptr.vmem [resolvable:$true] %s111
      %117 = dma.vmem_to_hbm [thread:$0]  %s112, 192, %s3, [#allocation4], 64, 64, 4
    $region37: #{tpu_custom_call.1} parent=1 // pred_fallthru
      _
    // Predicated region
    $region38: #{tpu_custom_call.1} parent=1 // pred_check
      _
    $region39: #{tpu_custom_call.1} parent=1 // pred_check_branch
      %119 = sbr.rel (0) target = $region41
    $region40: #{tpu_custom_call.1} parent=1 // pred_region
      %120 = dma.done [#allocation4], 192
    $region41: #{tpu_custom_call.1} parent=1 // pred_fallthru
      _
    %121 = vsyncpa [#allocation3], 1
    %122 = vsyncpa [#allocation6], 1
    %123 = vsyncpa [#allocation4], 1

</llo_original>
